<compile_context>
chip_gen: v6e
topology: v6e:2x2x1
jax: 0.10.0
libtpu: 0.0.40
codegen_flags: <defaults>
</compile_context>

<pallas_src>
import functools

import jax
import jax.numpy as jnp
from jax.experimental import pallas as pl
from jax.experimental.pallas import tpu as pltpu


def _round_up(x, m):
    return ((x + m - 1) // m) * m


def _cdiv(a, b):
    return (a + b - 1) // b


def _vmem_capacity_bytes():
    try:
        return int(pltpu.get_tpu_info().vmem_capacity_bytes)
    except Exception:
        return 64 * 1024 * 1024  # conservative fallback (v7x-sized VMEM)


def _vmem_budgets():
    """Return (tiling_budget_bytes, vmem_limit_bytes) for this generation."""
    cap = _vmem_capacity_bytes()
    if cap >= 128 * 1024 * 1024:          # v5e / v6e: 128 MiB physical VMEM
        return 56 * 1024 * 1024, 96 * 1024 * 1024
    # v7x-class (64 MiB physical): stay conservative, leave compiler headroom.
    return 36 * 1024 * 1024, 48 * 1024 * 1024


def _choose_tiles(n_rows, n_cols, x_itemsize, y_itemsize, budget):
    """Pick (row_tile, col_tile) so double-buffered inputs + temps fit `budget`."""

    def bytes_per_row(tc):
        # 2x (double-buffered) x & y input tiles + ~6 f32 temporaries per element.
        return 2 * tc * (x_itemsize + y_itemsize) + 6 * tc * 4

    # Single class tile whenever it still leaves a healthy row tile; otherwise
    # fall back to the C-tiled online-LSE path with a few-thousand-lane tile.
    if n_cols <= 2048 or budget // bytes_per_row(n_cols) >= 256:
        tc = n_cols                        # full class dim (always a legal block)
    else:
        tc = 2048                          # multiple of 128; ragged last tile masked

    tn = int(budget // bytes_per_row(tc))
    if n_rows >= 64:
        # Keep >= 2 row tiles so v7x's two TensorCores both get work under "parallel".
        tn = min(tn, _round_up(_cdiv(n_rows, 2), 32))
    if tn >= n_rows:
        tn = n_rows                        # full batch dim in one tile (legal block)
    else:
        tn = max(32, (tn // 32) * 32)      # 32-row align covers f32/bf16/int8 packing
    return tn, tc


def _ce_temp_kernel(x_ref, y_ref, o_ref, m_sc, l_sc, sy_sc, syx_sc, *,
                    inv_T, n_rows, n_cols, tn, tc):
    ri = pl.program_id(0)                  # row-tile index ("parallel", outer)
    ci = pl.program_id(1)                  # class-tile index ("arbitrary", inner)
    nc = pl.num_programs(1)

    # (Re)initialize the per-row online-LSE state at the first class tile.
    @pl.when(ci == 0)
    def _():
        m_sc[...] = jnp.full_like(m_sc, -jnp.inf)
        l_sc[...] = jnp.zeros_like(l_sc)
        sy_sc[...] = jnp.zeros_like(sy_sc)
        syx_sc[...] = jnp.zeros_like(syx_sc)

    x = x_ref[...].astype(jnp.float32) * inv_T     # logits / T   (f32 math)
    y = y_ref[...].astype(jnp.float32)             # raw targets; 1/T folded later

    # Ragged last row tile: neutralize out-of-range rows (x -> 0 keeps LSE finite,
    # y -> 0 zeroes their contribution). Replaces the old jnp.pad HBM copy.
    if n_rows % tn != 0:
        row_ok = (ri * tn + jax.lax.broadcasted_iota(jnp.int32, (tn, 1), 0)) < n_rows
        x = jnp.where(row_ok, x, 0.0)
        y = jnp.where(row_ok, y, 0.0)
    # Ragged last class tile: push invalid lanes far negative so exp -> 0 and the
    # row max is unaffected; zero their targets.
    if n_cols % tc != 0:
        col_ok = (ci * tc + jax.lax.broadcasted_iota(jnp.int32, (1, tc), 1)) < n_cols
        x = jnp.where(col_ok, x, -1e30)
        y = jnp.where(col_ok, y, 0.0)

    # Online log-sum-exp over the class axis (flash-softmax style).
    m_prev = m_sc[...]
    m_new = jnp.maximum(m_prev, jnp.max(x, axis=-1, keepdims=True))       # (TN, 1)
    l_sc[...] = (jnp.exp(m_prev - m_new) * l_sc[...]
                 + jnp.sum(jnp.exp(x - m_new), axis=-1, keepdims=True))
    m_sc[...] = m_new
    # Running rowsum(y) and sum_c y*(x/T) (both independent of the running max).
    sy_sc[...] = sy_sc[...] + jnp.sum(y, axis=-1, keepdims=True)
    syx_sc[...] = syx_sc[...] + jnp.sum(y * x, axis=-1, keepdims=True)

    # Finalize: per-row loss (up to the 1/T, 1/N factors) and per-tile reduce.
    @pl.when(ci == nc - 1)
    def _():
        lse = m_sc[...] + jnp.log(l_sc[...])                      # (TN, 1)
        partial = jnp.sum(sy_sc[...] * lse - syx_sc[...])         # scalar per row tile
        lane = jax.lax.broadcasted_iota(jnp.int32, o_ref.shape, 2)
        o_ref[...] = jnp.where(lane == 0, partial, 0.0).astype(o_ref.dtype)


def cross_entropy_with_temperature(x, y, T=1.0, *, row_tile=None, col_tile=None):
    """x: (N, C) logits, y: (N, C) soft targets. Returns scalar f32 loss."""
    assert x.shape == y.shape and x.ndim == 2
    n, c = x.shape
    budget, vmem_limit = _vmem_budgets()
    tn, tc = _choose_tiles(n, c, x.dtype.itemsize, y.dtype.itemsize, budget)
    if row_tile is not None:
        tn = row_tile
    if col_tile is not None:
        tc = col_tile

    num_row_tiles = _cdiv(n, tn)
    num_col_tiles = _cdiv(c, tc)

    kernel = functools.partial(
        _ce_temp_kernel, inv_T=1.0 / float(T), n_rows=n, n_cols=c, tn=tn, tc=tc)

    out_bytes = num_row_tiles * 128 * 4
    cost = pl.CostEstimate(
        flops=6 * n * c,
        transcendentals=n * c,
        bytes_accessed=(x.size * x.dtype.itemsize
                        + y.size * y.dtype.itemsize + out_bytes),
    )

    partials = pl.pallas_call(
        kernel,
        out_shape=jax.ShapeDtypeStruct((num_row_tiles, 1, 128), jnp.float32),
        grid=(num_row_tiles, num_col_tiles),
        in_specs=[
            pl.BlockSpec((tn, tc), lambda i, j: (i, j)),   # x tile
            pl.BlockSpec((tn, tc), lambda i, j: (i, j)),   # y tile
        ],
        out_specs=pl.BlockSpec((1, 1, 128), lambda i, j: (i, 0, 0)),
        scratch_shapes=[pltpu.VMEM((tn, 1), jnp.float32)] * 4,  # m, l, sum(y), sum(y*x/T)
        compiler_params=pltpu.CompilerParams(
            dimension_semantics=("parallel", "arbitrary"),
            vmem_limit_bytes=vmem_limit,
        ),
        cost_estimate=cost,
    )(x, y)

    # Each row-tile scalar sits in lane 0 (zeros elsewhere) -> contiguous sum.
    # Fold the target 1/T scale and the 1/N mean into a single multiply.
    return jnp.sum(partials) * (1.0 / (float(T) * n))


def _reference(x, y, T):
    xs = x.astype(jnp.float32) / T
    ys = y.astype(jnp.float32) / T
    logsm = jax.nn.log_softmax(xs, axis=-1)
    return jnp.mean(-jnp.sum(ys * logsm, axis=-1))


if __name__ == "__main__":
    key = jax.random.PRNGKey(0)
    kx, ky = jax.random.split(key)

    T = 2.0
    N, C = 20, 256   # small; N deliberately not tile-aligned below

    x = jax.random.normal(kx, (N, C), dtype=jnp.float32)
    # Soft targets: a probability distribution per row (what torch expects here).
    y = jax.nn.softmax(jax.random.normal(ky, (N, C), dtype=jnp.float32), axis=-1)
    ref = _reference(x, y, T)

    # 1) Default tiling (single row tile, single class tile).
    loss = cross_entropy_with_temperature(x, y, T=T)
    jax.block_until_ready(loss)
    assert jnp.allclose(loss, ref, rtol=1e-5, atol=1e-5), (loss, ref)

    # 2) Ragged row tiles + C-tiled online-LSE path (exercises masking + accumulator).
    loss2 = cross_entropy_with_temperature(x, y, T=T, row_tile=16, col_tile=128)
    jax.block_until_ready(loss2)
    assert jnp.allclose(loss2, ref, rtol=1e-5, atol=1e-5), (loss2, ref)

    # 3) bf16 inputs over HBM (bandwidth win); all kernel math stays f32.
    xb = x.astype(jnp.bfloat16)
    yb = y.astype(jnp.bfloat16)
    loss_b = cross_entropy_with_temperature(xb, yb, T=T, row_tile=16, col_tile=128)
    jax.block_until_ready(loss_b)
    ref_b = _reference(xb, yb, T)
    assert jnp.allclose(loss_b, ref_b, rtol=1e-3, atol=1e-3), (loss_b, ref_b)

    # 4) Ragged class tiles (C not a multiple of the lane tile).
    C2 = 200
    x2 = jax.random.normal(kx, (N, C2), dtype=jnp.float32)
    y2 = jax.nn.softmax(jax.random.normal(ky, (N, C2), dtype=jnp.float32), axis=-1)
    loss3 = cross_entropy_with_temperature(x2, y2, T=T, row_tile=16, col_tile=128)
    jax.block_until_ready(loss3)
    ref3 = _reference(x2, y2, T)
    assert jnp.allclose(loss3, ref3, rtol=1e-5, atol=1e-5), (loss3, ref3)

    print("KERNEL_OK")
</pallas_src>

<mosaic_0001>
module attributes {stable_mosaic.version = 11 : i64} {
  func.func @_ce_temp_kernel(%arg0: i32, %arg1: i32, %arg2: memref<20x256xf32, #tpu.memory_space<vmem>>, %arg3: memref<20x256xf32, #tpu.memory_space<vmem>>, %arg4: memref<1x1x128xf32, #tpu.memory_space<vmem>>, %arg5: memref<20x1xf32, #tpu.memory_space<vmem>>, %arg6: memref<20x1xf32, #tpu.memory_space<vmem>>, %arg7: memref<20x1xf32, #tpu.memory_space<vmem>>, %arg8: memref<20x1xf32, #tpu.memory_space<vmem>>) attributes {dimension_semantics = [#tpu.dimension_semantics<parallel>, #tpu.dimension_semantics<arbitrary>], iteration_bounds = array<i64: 1, 1>, scalar_prefetch = 0 : i64, scratch_operands = 4 : i64, tpu.core_type = #tpu.core_type<tc>, window_params = [{transform_indices = @transform_0, window_bounds = array<i64: 20, 256>}, {transform_indices = @transform_1, window_bounds = array<i64: 20, 256>}, {transform_indices = @transform_2, window_bounds = array<i64: 1, 1, 128>}]} {
    %c0_i32 = arith.constant 0 : i32
    %0 = arith.cmpi eq, %arg1, %c0_i32 : i32
    %1 = arith.extui %0 : i1 to i32
    %c0_i32_0 = arith.constant 0 : i32
    %2 = arith.cmpi ne, %1, %c0_i32_0 : i32
    scf.if %2 {
      %cst_26 = arith.constant 0xFF800000 : f32
      %37 = vector.broadcast %cst_26 : f32 to vector<20x1xf32>
      %c0_27 = arith.constant 0 : index
      %c0_28 = arith.constant 0 : index
      %38 = vector.load %arg5[%c0_27, %c0_28] : memref<20x1xf32, #tpu.memory_space<vmem>>, vector<20x1xf32>
      tpu.vector_store %arg5[%c0_27, %c0_28], %37 {strides = array<i32>} : memref<20x1xf32, #tpu.memory_space<vmem>>, vector<20x1xf32>,
      %cst_29 = arith.constant 0.000000e+00 : f32
      %39 = vector.broadcast %cst_29 : f32 to vector<20x1xf32>
      %c0_30 = arith.constant 0 : index
      %c0_31 = arith.constant 0 : index
      %40 = vector.load %arg6[%c0_30, %c0_31] : memref<20x1xf32, #tpu.memory_space<vmem>>, vector<20x1xf32>
      tpu.vector_store %arg6[%c0_30, %c0_31], %39 {strides = array<i32>} : memref<20x1xf32, #tpu.memory_space<vmem>>, vector<20x1xf32>,
      %cst_32 = arith.constant 0.000000e+00 : f32
      %41 = vector.broadcast %cst_32 : f32 to vector<20x1xf32>
      %c0_33 = arith.constant 0 : index
      %c0_34 = arith.constant 0 : index
      %42 = vector.load %arg7[%c0_33, %c0_34] : memref<20x1xf32, #tpu.memory_space<vmem>>, vector<20x1xf32>
      tpu.vector_store %arg7[%c0_33, %c0_34], %41 {strides = array<i32>} : memref<20x1xf32, #tpu.memory_space<vmem>>, vector<20x1xf32>,
      %cst_35 = arith.constant 0.000000e+00 : f32
      %43 = vector.broadcast %cst_35 : f32 to vector<20x1xf32>
      %c0_36 = arith.constant 0 : index
      %c0_37 = arith.constant 0 : index
      %44 = vector.load %arg8[%c0_36, %c0_37] : memref<20x1xf32, #tpu.memory_space<vmem>>, vector<20x1xf32>
      tpu.vector_store %arg8[%c0_36, %c0_37], %43 {strides = array<i32>} : memref<20x1xf32, #tpu.memory_space<vmem>>, vector<20x1xf32>,
    } else {
    }
    %c0 = arith.constant 0 : index
    %c0_1 = arith.constant 0 : index
    %3 = vector.load %arg2[%c0, %c0_1] : memref<20x256xf32, #tpu.memory_space<vmem>>, vector<20x256xf32>
    %cst = arith.constant 5.000000e-01 : f32
    %4 = vector.broadcast %cst : f32 to vector<20x256xf32>
    %5 = arith.mulf %3, %4 : vector<20x256xf32>
    %c0_2 = arith.constant 0 : index
    %c0_3 = arith.constant 0 : index
    %6 = vector.load %arg3[%c0_2, %c0_3] : memref<20x256xf32, #tpu.memory_space<vmem>>, vector<20x256xf32>
    %c0_4 = arith.constant 0 : index
    %c0_5 = arith.constant 0 : index
    %7 = vector.load %arg5[%c0_4, %c0_5] : memref<20x1xf32, #tpu.memory_space<vmem>>, vector<20x1xf32>
    %cst_6 = arith.constant dense<0xFF800000> : vector<20xf32>
    %8 = vector.multi_reduction <maximumf>, %5, %cst_6 [1] : vector<20x256xf32> to vector<20xf32>
    %9 = vector.shape_cast %8 : vector<20xf32> to vector<20x1xf32>
    %10 = arith.maximumf %7, %9 : vector<20x1xf32>
    %11 = arith.subf %7, %10 : vector<20x1xf32>
    %12 = math.exp %11 : vector<20x1xf32>
    %c0_7 = arith.constant 0 : index
    %c0_8 = arith.constant 0 : index
    %13 = vector.load %arg6[%c0_7, %c0_8] : memref<20x1xf32, #tpu.memory_space<vmem>>, vector<20x1xf32>
    %14 = arith.mulf %12, %13 : vector<20x1xf32>
    %15 = vector.broadcast %10 : vector<20x1xf32> to vector<20x256xf32>
    %16 = arith.subf %5, %15 : vector<20x256xf32>
    %17 = math.exp %16 : vector<20x256xf32>
    %cst_9 = arith.constant dense<0.000000e+00> : vector<20xf32>
    %18 = vector.multi_reduction <add>, %17, %cst_9 [1] : vector<20x256xf32> to vector<20xf32>
    %19 = vector.shape_cast %18 : vector<20xf32> to vector<20x1xf32>
    %20 = arith.addf %14, %19 : vector<20x1xf32>
    %c0_10 = arith.constant 0 : index
    %c0_11 = arith.constant 0 : index
    %21 = vector.load %arg6[%c0_10, %c0_11] : memref<20x1xf32, #tpu.memory_space<vmem>>, vector<20x1xf32>
    tpu.vector_store %arg6[%c0_10, %c0_11], %20 {strides = array<i32>} : memref<20x1xf32, #tpu.memory_space<vmem>>, vector<20x1xf32>,
    %c0_12 = arith.constant 0 : index
    %c0_13 = arith.constant 0 : index
    %22 = vector.load %arg5[%c0_12, %c0_13] : memref<20x1xf32, #tpu.memory_space<vmem>>, vector<20x1xf32>
    tpu.vector_store %arg5[%c0_12, %c0_13], %10 {strides = array<i32>} : memref<20x1xf32, #tpu.memory_space<vmem>>, vector<20x1xf32>,
    %c0_14 = arith.constant 0 : index
    %c0_15 = arith.constant 0 : index
    %23 = vector.load %arg7[%c0_14, %c0_15] : memref<20x1xf32, #tpu.memory_space<vmem>>, vector<20x1xf32>
    %cst_16 = arith.constant dense<0.000000e+00> : vector<20xf32>
    %24 = vector.multi_reduction <add>, %6, %cst_16 [1] : vector<20x256xf32> to vector<20xf32>
    %25 = vector.shape_cast %24 : vector<20xf32> to vector<20x1xf32>
    %26 = arith.addf %23, %25 : vector<20x1xf32>
    %c0_17 = arith.constant 0 : index
    %c0_18 = arith.constant 0 : index
    %27 = vector.load %arg7[%c0_17, %c0_18] : memref<20x1xf32, #tpu.memory_space<vmem>>, vector<20x1xf32>
    tpu.vector_store %arg7[%c0_17, %c0_18], %26 {strides = array<i32>} : memref<20x1xf32, #tpu.memory_space<vmem>>, vector<20x1xf32>,
    %c0_19 = arith.constant 0 : index
    %c0_20 = arith.constant 0 : index
    %28 = vector.load %arg8[%c0_19, %c0_20] : memref<20x1xf32, #tpu.memory_space<vmem>>, vector<20x1xf32>
    %29 = arith.mulf %6, %5 : vector<20x256xf32>
    %cst_21 = arith.constant dense<0.000000e+00> : vector<20xf32>
    %30 = vector.multi_reduction <add>, %29, %cst_21 [1] : vector<20x256xf32> to vector<20xf32>
    %31 = vector.shape_cast %30 : vector<20xf32> to vector<20x1xf32>
    %32 = arith.addf %28, %31 : vector<20x1xf32>
    %c0_22 = arith.constant 0 : index
    %c0_23 = arith.constant 0 : index
    %33 = vector.load %arg8[%c0_22, %c0_23] : memref<20x1xf32, #tpu.memory_space<vmem>>, vector<20x1xf32>
    tpu.vector_store %arg8[%c0_22, %c0_23], %32 {strides = array<i32>} : memref<20x1xf32, #tpu.memory_space<vmem>>, vector<20x1xf32>,
    %c0_i32_24 = arith.constant 0 : i32
    %34 = arith.cmpi eq, %arg1, %c0_i32_24 : i32
    %35 = arith.extui %34 : i1 to i32
    %c0_i32_25 = arith.constant 0 : i32
    %36 = arith.cmpi ne, %35, %c0_i32_25 : i32
    scf.if %36 {
      %c0_26 = arith.constant 0 : index
      %c0_27 = arith.constant 0 : index
      %37 = vector.load %arg5[%c0_26, %c0_27] : memref<20x1xf32, #tpu.memory_space<vmem>>, vector<20x1xf32>
      %c0_28 = arith.constant 0 : index
      %c0_29 = arith.constant 0 : index
      %38 = vector.load %arg6[%c0_28, %c0_29] : memref<20x1xf32, #tpu.memory_space<vmem>>, vector<20x1xf32>
      %39 = math.log %38 : vector<20x1xf32>
      %40 = arith.addf %37, %39 : vector<20x1xf32>
      %c0_30 = arith.constant 0 : index
      %c0_31 = arith.constant 0 : index
      %41 = vector.load %arg7[%c0_30, %c0_31] : memref<20x1xf32, #tpu.memory_space<vmem>>, vector<20x1xf32>
      %42 = arith.mulf %41, %40 : vector<20x1xf32>
      %c0_32 = arith.constant 0 : index
      %c0_33 = arith.constant 0 : index
      %43 = vector.load %arg8[%c0_32, %c0_33] : memref<20x1xf32, #tpu.memory_space<vmem>>, vector<20x1xf32>
      %44 = arith.subf %42, %43 : vector<20x1xf32>
      %45 = vector.shape_cast %44 : vector<20x1xf32> to vector<1x20x1xf32>
      %cst_34 = arith.constant dense<0.000000e+00> : vector<1xf32>
      %46 = vector.multi_reduction <add>, %45, %cst_34 [1, 2] : vector<1x20x1xf32> to vector<1xf32>
      %47 = vector.shape_cast %46 : vector<1xf32> to vector<1x1x1xf32>
      %48 = vector.extract %47[0, 0, 0] : f32 from vector<1x1x1xf32>
      %49 = tpu.iota {dimensions = array<i32: 2>} : vector<1x1x128xi32>
      %c0_i32_35 = arith.constant 0 : i32
      %50 = vector.broadcast %c0_i32_35 : i32 to vector<1x1x128xi32>
      %51 = arith.cmpi eq, %49, %50 : vector<1x1x128xi32>
      %cst_36 = arith.constant 0.000000e+00 : f32
      %52 = vector.broadcast %48 : f32 to vector<1x1x128xf32>
      %53 = vector.broadcast %cst_36 : f32 to vector<1x1x128xf32>
      %54 = arith.select %51, %52, %53 : vector<1x1x128xi1>, vector<1x1x128xf32>
      %c0_37 = arith.constant 0 : index
      %c0_38 = arith.constant 0 : index
      %c0_39 = arith.constant 0 : index
      %55 = vector.load %arg4[%c0_37, %c0_38, %c0_39] : memref<1x1x128xf32, #tpu.memory_space<vmem>>, vector<1x1x128xf32>
      tpu.vector_store %arg4[%c0_37, %c0_38, %c0_39], %54 {strides = array<i32>} : memref<1x1x128xf32, #tpu.memory_space<vmem>>, vector<1x1x128xf32>,
    } else {
    }
    return
  }
  func.func @transform_0(%arg0: i32, %arg1: i32) -> (i32, i32) {
    %c0_i32 = arith.constant 0 : i32
    return %arg0, %arg1 : i32, i32
  }
  func.func @transform_1(%arg0: i32, %arg1: i32) -> (i32, i32) {
    %c0_i32 = arith.constant 0 : i32
    return %arg0, %arg1 : i32, i32
  }
  func.func @transform_2(%arg0: i32, %arg1: i32) -> (i32, i32, i32) {
    %c0_i32 = arith.constant 0 : i32
    %c0_i32_0 = arith.constant 0 : i32
    %c0_i32_1 = arith.constant 0 : i32
    return %arg0, %c0_i32, %c0_i32_0 : i32, i32, i32
  }
}

</mosaic_0001>

<llo_original>
// kernel: tpu_custom_call.1
$region0: #{tpu_custom_call.1}
  #allocation0 [shape = 'u32[]', space=smem, size = 0x4, offset = 0x4, fixed_abs, tag = 'smem constant byte address 0x4 - core index']
  #allocation1 [shape = 'u32[144,128]{1,0:T(1,128)}', space=vmem, size = 0x12000, scoped, tag = 'internal scratch']
  #allocation2 [shape = 'f32[20,1]{1,0:T(8,128)}', space=vmem, size = 0x3000, scoped, tag = 'scratch operand']
  #allocation3 [shape = 'f32[20,1]{1,0:T(8,128)}', space=vmem, size = 0x3000, scoped, tag = 'scratch operand']
  #allocation4 [shape = 'f32[20,1]{1,0:T(8,128)}', space=vmem, size = 0x3000, scoped, tag = 'scratch operand']
  #allocation5 [shape = 'f32[20,1]{1,0:T(8,128)}', space=vmem, size = 0x3000, scoped, tag = 'scratch operand']
  %s0 = inlined_call_operand.hbm [shape: f32[20,256], index: 0, kind: input, shape index: {}]
  %s1 = inlined_call_operand.hbm [shape: f32[20,256], index: 1, kind: input, shape index: {}]
  %s2 = inlined_call_operand.hbm [shape: f32[1,1,128], index: 2, kind: output, shape index: {}]
  %s3 = sld [smem:[#allocation0]]
  $region34: #{tpu_custom_call.1} parent=0
    _
  %s5 = ssub.s32 1, %s3
  %s6 = scalar_select 0, %s5, %s3
  $region1: #{tpu_custom_call.1} parent=0
    #allocation6 [shape = 'u8[24576]{0}', space=vmem, size = 0x6000, scoped, tag = 'input window, operand 0, single buffered']
    #allocation7 [shape = 's32[1]{0}', space=sflag, size = 0x4, scoped, tag = 'scoped memory for tpu_custom_call.1']
    #allocation8 [shape = 's32[1]{0}', space=sflag, size = 0x4, scoped, tag = 'scoped memory for tpu_custom_call.1']
    #allocation9 [shape = 'u8[24576]{0}', space=vmem, size = 0x6000, scoped, tag = 'input window, operand 1, single buffered']
    #allocation10 [shape = 's32[1]{0}', space=sflag, size = 0x4, scoped, tag = 'scoped memory for tpu_custom_call.1']
    #allocation11 [shape = 'u8[512]{0}', space=vmem, size = 0x400, scoped, tag = 'output window, operand 0, single buffered']
    %7 = vsyncpa [#allocation7], 0
    %8 = vsyncpa [#allocation10], 0
    %9 = vsyncpa [#allocation8], 0
    // Predicated region
    $region2: #{tpu_custom_call.1} parent=1 // pred_check
      _
    $region3: #{tpu_custom_call.1} parent=1 // pred_check_branch
      %11 = sbr.rel (0) target = $region5
    $region4: #{tpu_custom_call.1} parent=1 // pred_region
      %s13 = ssub.s32 768, 768
      %14 = vsyncadd [#allocation7], %s13
      %s15 = sshll.u32 [#allocation6], 4
      %s16 = int_to_ptr.vmem [resolvable:$true] %s15
      %21 = dma.hbm_to_vmem [thread:$0]  %s0, 768, %s16, [#allocation7], 256, 256, 16
    $region5: #{tpu_custom_call.1} parent=1 // pred_fallthru
      _
    // Predicated region
    $region6: #{tpu_custom_call.1} parent=1 // pred_check
      _
    $region7: #{tpu_custom_call.1} parent=1 // pred_check_branch
      %23 = sbr.rel (0) target = $region9
    $region8: #{tpu_custom_call.1} parent=1 // pred_region
      %s25 = ssub.s32 768, 768
      %26 = vsyncadd [#allocation10], %s25
      %s27 = sshll.u32 [#allocation9], 4
      %s28 = int_to_ptr.vmem [resolvable:$true] %s27
      %33 = dma.hbm_to_vmem [thread:$0]  %s1, 768, %s28, [#allocation10], 256, 256, 16
    $region9: #{tpu_custom_call.1} parent=1 // pred_fallthru
      _
    // Predicated region
    $region10: #{tpu_custom_call.1} parent=1 // pred_check
      _
    $region11: #{tpu_custom_call.1} parent=1 // pred_check_branch
      %35 = sbr.rel (0) target = $region13
    $region12: #{tpu_custom_call.1} parent=1 // pred_region
      %36 = dma.done [#allocation7], 768
    $region13: #{tpu_custom_call.1} parent=1 // pred_fallthru
      _
    // Predicated region
    $region14: #{tpu_custom_call.1} parent=1 // pred_check
      _
    $region15: #{tpu_custom_call.1} parent=1 // pred_check_branch
      %38 = sbr.rel (0) target = $region17
    $region16: #{tpu_custom_call.1} parent=1 // pred_region
      %39 = dma.done [#allocation10], 768
    $region17: #{tpu_custom_call.1} parent=1 // pred_fallthru
      _
    %p40 = scmp.eq.s32.totalorder 0, 0
    // Predicated region
    $region18: #{tpu_custom_call.1} parent=1 // pred_check
      %p41 = pneg %p40
    $region19: #{tpu_custom_call.1} parent=1 // pred_check_branch
      %43 = sbr.rel (%p41) target = $region21
    $region20: #{tpu_custom_call.1} parent=1 // pred_region
      %vm44 = vcmask 7168
      %45 = vst.msk [vmem:[#allocation2] sm:$0xff] %vm44, -inf
      %46 = vst.msk [vmem:[#allocation2 + $0x8] sm:$0xff] %vm44, -inf
      %vm47 = vcmask 3072
      %48 = vst.msk [vmem:[#allocation2 + $0x10] sm:$0xf] %vm47, -inf
      %49 = vst.msk [vmem:[#allocation3] sm:$0xff] %vm44, 0.0
      %50 = vst.msk [vmem:[#allocation3 + $0x8] sm:$0xff] %vm44, 0.0
      %51 = vst.msk [vmem:[#allocation3 + $0x10] sm:$0xf] %vm47, 0.0
      %52 = vst.msk [vmem:[#allocation4] sm:$0xff] %vm44, 0.0
      %53 = vst.msk [vmem:[#allocation4 + $0x8] sm:$0xff] %vm44, 0.0
      %54 = vst.msk [vmem:[#allocation4 + $0x10] sm:$0xf] %vm47, 0.0
      %55 = vst.msk [vmem:[#allocation5] sm:$0xff] %vm44, 0.0
      %56 = vst.msk [vmem:[#allocation5 + $0x8] sm:$0xff] %vm44, 0.0
      %57 = vst.msk [vmem:[#allocation5 + $0x10] sm:$0xf] %vm47, 0.0
    $region21: #{tpu_custom_call.1} parent=1 // pred_fallthru
      _
    %v58 = vld [vmem:[#allocation6] sm:$0xff]
    %v59 = vld [vmem:[#allocation6 + $0x8] sm:$0xff]
    %v60 = vld [vmem:[#allocation6 + $0x10] sm:$0xff]
    %v61 = vld [vmem:[#allocation6 + $0x18] sm:$0xff]
    %v62 = vld [vmem:[#allocation6 + $0x20] sm:$0xf]
    %v63 = vld [vmem:[#allocation6 + $0x28] sm:$0xf]
    %v64 = vmul.f32 %v58, 0.5
    %v65 = vmul.f32 %v59, 0.5
    %v66 = vmul.f32 %v60, 0.5
    %v67 = vmul.f32 %v61, 0.5
    %v68 = vmul.f32 %v62, 0.5
    %v69 = vmul.f32 %v63, 0.5
    %v70 = vld [vmem:[#allocation9] sm:$0xff]
    %v71 = vld [vmem:[#allocation9 + $0x8] sm:$0xff]
    %v72 = vld [vmem:[#allocation9 + $0x10] sm:$0xff]
    %v73 = vld [vmem:[#allocation9 + $0x18] sm:$0xff]
    %v74 = vld [vmem:[#allocation9 + $0x20] sm:$0xf]
    %v75 = vld [vmem:[#allocation9 + $0x28] sm:$0xf]
    %v76 = vld [vmem:[#allocation2] sm:$0xff]
    %v77 = vld [vmem:[#allocation2 + $0x8] sm:$0xff]
    %v78 = vld [vmem:[#allocation2 + $0x10] sm:$0xf]
    %v79 = vmax.f32 %v64, %v65
    %80 = vmax.xlane.f32.xlu0 %v79
    %v81 = vpop.xlane.xlu0 %80
    %v82 = vmax.f32 %v66, %v67
    %83 = vmax.xlane.f32.xlu0 %v82
    %v84 = vpop.xlane.xlu0 %83
    %vm85 = vcmask 1043456
    %v86 = vsel %vm85, %v68, -inf
    %v87 = vsel %vm85, %v69, -inf
    %v88 = vmax.f32 %v86, %v87
    %89 = vmax.xlane.f32.xlu0 %v88
    %v90 = vpop.xlane.xlu0 %89
    %v91 = vmax.f32 %v76, %v81
    %v92 = vmax.f32 %v77, %v84
    %v93 = vmax.f32 %v78, %v90
    %v94 = vsub.f32 %v76, %v91
    %v95 = vsub.f32 %v77, %v92
    %v96 = vsub.f32 %v78, %v93
    %v97 = vmul.f32 %v94, 1.442695
    %v98 = vpow.pop %v97
    %v99 = vmul.f32 %v95, 1.442695
    %v100 = vpow.pop %v99
    %v101 = vmul.f32 %v96, 1.442695
    %v102 = vpow.pop %v101
    %v103 = vld [vmem:[#allocation3] sm:$0xff]
    %v104 = vld [vmem:[#allocation3 + $0x8] sm:$0xff]
    %v105 = vld [vmem:[#allocation3 + $0x10] sm:$0xf]
    %v106 = vmul.f32 %v98, %v103
    %v107 = vmul.f32 %v100, %v104
    %v108 = vmul.f32 %v102, %v105
    %110 = vset.pattern.permute.xlu0 0
    %111 = vperm.xlu0 %110, %v91
    %v112 = vpop.permute.xlu0 %111
    %115 = vset.pattern.permute.xlu0 0
    %116 = vperm.xlu0 %115, %v92
    %v117 = vpop.permute.xlu0 %116
    %120 = vset.pattern.permute.xlu0 0
    %121 = vperm.xlu0 %120, %v93
    %v122 = vpop.permute.xlu0 %121
    %v124 = vsub.f32 %v64, %v112
    %v125 = vsub.f32 %v65, %v112
    %v126 = vsub.f32 %v66, %v117
    %v127 = vsub.f32 %v67, %v117
    %v128 = vsub.f32 %v68, %v122
    %v129 = vsub.f32 %v69, %v122
    %v130 = vmul.f32 %v124, 1.442695
    %v131 = vpow.pop %v130
    %v132 = vmul.f32 %v125, 1.442695
    %v133 = vpow.pop %v132
    %v134 = vmul.f32 %v126, 1.442695
    %v135 = vpow.pop %v134
    %v136 = vmul.f32 %v127, 1.442695
    %v137 = vpow.pop %v136
    %v138 = vmul.f32 %v128, 1.442695
    %v139 = vpow.pop %v138
    %v140 = vmul.f32 %v129, 1.442695
    %v141 = vpow.pop %v140
    %v142 = vadd.f32 %v131, %v133
    %143 = vadd.xlane.f32.xlu0 %v142
    %v144 = vpop.xlane.xlu0 %143
    %v145 = vadd.f32 %v135, %v137
    %146 = vadd.xlane.f32.xlu0 %v145
    %v147 = vpop.xlane.xlu0 %146
    %v148 = vsel %vm85, %v139, 0.0
    %v149 = vsel %vm85, %v141, 0.0
    %v150 = vadd.f32 %v148, %v149
    %151 = vadd.xlane.f32.xlu0 %v150
    %v152 = vpop.xlane.xlu0 %151
    %v153 = vadd.f32 %v106, %v144
    %v154 = vadd.f32 %v107, %v147
    %v155 = vadd.f32 %v108, %v152
    %vm156 = vcmask 7168
    %157 = vst.msk [vmem:[#allocation3] sm:$0xff] %vm156, %v153
    %158 = vst.msk [vmem:[#allocation3 + $0x8] sm:$0xff] %vm156, %v154
    %vm159 = vcmask 3072
    %160 = vst.msk [vmem:[#allocation3 + $0x10] sm:$0xf] %vm159, %v155
    %161 = vst.msk [vmem:[#allocation2] sm:$0xff] %vm156, %v91
    %162 = vst.msk [vmem:[#allocation2 + $0x8] sm:$0xff] %vm156, %v92
    %163 = vst.msk [vmem:[#allocation2 + $0x10] sm:$0xf] %vm159, %v93
    %v164 = vld [vmem:[#allocation4] sm:$0xff]
    %v165 = vld [vmem:[#allocation4 + $0x8] sm:$0xff]
    %v166 = vld [vmem:[#allocation4 + $0x10] sm:$0xf]
    %v167 = vadd.f32 %v70, %v71
    %168 = vadd.xlane.f32.xlu0 %v167
    %v169 = vpop.xlane.xlu0 %168
    %v170 = vadd.f32 %v72, %v73
    %171 = vadd.xlane.f32.xlu0 %v170
    %v172 = vpop.xlane.xlu0 %171
    %v173 = vsel %vm85, %v74, 0.0
    %v174 = vsel %vm85, %v75, 0.0
    %v175 = vadd.f32 %v173, %v174
    %176 = vadd.xlane.f32.xlu0 %v175
    %v177 = vpop.xlane.xlu0 %176
    %v178 = vadd.f32 %v164, %v169
    %v179 = vadd.f32 %v165, %v172
    %v180 = vadd.f32 %v166, %v177
    %181 = vst.msk [vmem:[#allocation4] sm:$0xff] %vm156, %v178
    %182 = vst.msk [vmem:[#allocation4 + $0x8] sm:$0xff] %vm156, %v179
    %183 = vst.msk [vmem:[#allocation4 + $0x10] sm:$0xf] %vm159, %v180
    %v184 = vld [vmem:[#allocation5] sm:$0xff]
    %v185 = vld [vmem:[#allocation5 + $0x8] sm:$0xff]
    %v186 = vld [vmem:[#allocation5 + $0x10] sm:$0xf]
    %v187 = vmul.f32 %v70, %v64
    %v188 = vmul.f32 %v71, %v65
    %v189 = vmul.f32 %v72, %v66
    %v190 = vmul.f32 %v73, %v67
    %v191 = vmul.f32 %v74, %v68
    %v192 = vmul.f32 %v75, %v69
    %v193 = vadd.f32 %v187, %v188
    %194 = vadd.xlane.f32.xlu0 %v193
    %v195 = vpop.xlane.xlu0 %194
    %v196 = vadd.f32 %v189, %v190
    %197 = vadd.xlane.f32.xlu0 %v196
    %v198 = vpop.xlane.xlu0 %197
    %v199 = vsel %vm85, %v191, 0.0
    %v200 = vsel %vm85, %v192, 0.0
    %v201 = vadd.f32 %v199, %v200
    %202 = vadd.xlane.f32.xlu0 %v201
    %v203 = vpop.xlane.xlu0 %202
    %v204 = vadd.f32 %v184, %v195
    %v205 = vadd.f32 %v185, %v198
    %v206 = vadd.f32 %v186, %v203
    %207 = vst.msk [vmem:[#allocation5] sm:$0xff] %vm156, %v204
    %208 = vst.msk [vmem:[#allocation5 + $0x8] sm:$0xff] %vm156, %v205
    %209 = vst.msk [vmem:[#allocation5 + $0x10] sm:$0xf] %vm159, %v206
    // Predicated region
    $region22: #{tpu_custom_call.1} parent=1 // pred_check
      %p210 = pneg %p40
    $region23: #{tpu_custom_call.1} parent=1 // pred_check_branch
      %212 = sbr.rel (%p210) target = $region25
    $region24: #{tpu_custom_call.1} parent=1 // pred_region
      %v213 = vld [vmem:[#allocation2] sm:$0xff]
      %v214 = vld [vmem:[#allocation2 + $0x8] sm:$0xff]
      %v215 = vld [vmem:[#allocation2 + $0x10] sm:$0xf]
      %v216 = vld [vmem:[#allocation3] sm:$0xff]
      %v217 = vld [vmem:[#allocation3 + $0x8] sm:$0xff]
      %v218 = vld [vmem:[#allocation3 + $0x10] sm:$0xf]
      %v219 = vlog2.pop %v216
      %v220 = vmul.f32 %v219, 0.6931472
      %v221 = vlog2.pop %v217
      %v222 = vmul.f32 %v221, 0.6931472
      %v223 = vlog2.pop %v218
      %v224 = vmul.f32 %v223, 0.6931472
      %v225 = vadd.f32 %v213, %v220
      %v226 = vadd.f32 %v214, %v222
      %v227 = vadd.f32 %v215, %v224
      %v228 = vld [vmem:[#allocation4] sm:$0xff]
      %v229 = vld [vmem:[#allocation4 + $0x8] sm:$0xff]
      %v230 = vld [vmem:[#allocation4 + $0x10] sm:$0xf]
      %v231 = vmul.f32 %v228, %v225
      %v232 = vmul.f32 %v229, %v226
      %v233 = vmul.f32 %v230, %v227
      %v234 = vld [vmem:[#allocation5] sm:$0xff]
      %v235 = vld [vmem:[#allocation5 + $0x8] sm:$0xff]
      %v236 = vld [vmem:[#allocation5 + $0x10] sm:$0xf]
      %v237 = vsub.f32 %v231, %v234
      %v238 = vsub.f32 %v232, %v235
      %v239 = vsub.f32 %v233, %v236
      %v240 = vsel %vm156, %v237, 0.0
      %v241 = vsel %vm156, %v238, 0.0
      %v242 = vadd.f32 %v240, %v241
      %v243 = vsel %vm159, %v239, 0.0
      %v244 = vadd.f32 %v242, %v243
      %245 = vadd.xlane.f32.xlu0 %v244
      %v246 = vpop.xlane.xlu0 %245
      %v247 = vrot.slane %v246, 4
      %v248 = vadd.f32 %v246, %v247
      %v249 = vrot.slane %v248, 2
      %v250 = vadd.f32 %v248, %v249
      %v251 = vrot.slane %v250, 1
      %v252 = vadd.f32 %v250, %v251
      %s253 = vtos %v252
      %v254 = vlaneseq
      %v255 = vand.u32 %v254, 127
      %vm256 = vcmp.eq.s32.totalorder %v255, 0
      %v257 = vstv %s253
      %v258 = vsel %vm256, %v257, 0.0
      %259 = vst [vmem:[#allocation11] sm:$0x1] %v258
    $region25: #{tpu_custom_call.1} parent=1 // pred_fallthru
      _
    // Predicated region
    $region26: #{tpu_custom_call.1} parent=1 // pred_check
      _
    $region27: #{tpu_custom_call.1} parent=1 // pred_check_branch
      %261 = sbr.rel (0) target = $region29
    $region28: #{tpu_custom_call.1} parent=1 // pred_region
      %s263 = ssub.s32 16, 16
      %264 = vsyncadd [#allocation8], %s263
      %s266 = sshll.u32 [#allocation11], 4
      %s267 = int_to_ptr.vmem [resolvable:$true] %s266
      %269 = dma.vmem_to_hbm [thread:$0]  %s267, 16, %s2, [#allocation8]
    $region29: #{tpu_custom_call.1} parent=1 // pred_fallthru
      _
    // Predicated region
    $region30: #{tpu_custom_call.1} parent=1 // pred_check
      _
    $region31: #{tpu_custom_call.1} parent=1 // pred_check_branch
      %271 = sbr.rel (0) target = $region33
    $region32: #{tpu_custom_call.1} parent=1 // pred_region
      %272 = dma.done [#allocation8], 16
    $region33: #{tpu_custom_call.1} parent=1 // pred_fallthru
      _
    %273 = vsyncpa [#allocation7], 1
    %274 = vsyncpa [#allocation10], 1
    %275 = vsyncpa [#allocation8], 1

</llo_original>
